<compile_context>
chip_gen: v7x
topology: tpu7x:2x2x1
jax: 0.10.0
libtpu: 0.0.40
codegen_flags: <defaults>
</compile_context>

<pallas_src>
import math

import jax
import jax.numpy as jnp
from jax.experimental import pallas as pl
from jax.experimental.pallas import tpu as pltpu


def _round_up(v, m):
    return ((v + m - 1) // m) * m


# -----------------------------------------------------------------------------
# Small-problem path: grid over the 2 splits, fully fused matmul + bias per step.
# -----------------------------------------------------------------------------
def _small_kernel(x_ref, w_ref, b_ref, o_ref):
    # x_ref: (N, In), w_ref: (In, Out), b_ref: (1, Out), o_ref: (N, Out)
    acc = jnp.dot(x_ref[...], w_ref[...], preferred_element_type=jnp.float32)
    o_ref[...] = (acc + b_ref[...].astype(jnp.float32)).astype(o_ref.dtype)


# -----------------------------------------------------------------------------
# Tiled path: grid = (S, j_out, i_row, k_in); f32 accumulator; bias on last K step.
# -----------------------------------------------------------------------------
def _tiled_kernel(x_ref, w_ref, b_ref, o_ref, acc_ref):
    # x_ref: (tm, tk), w_ref: (tk, tn), b_ref: (1, tn), o_ref: (tm, tn)
    k = pl.program_id(3)

    @pl.when(k == 0)
    def _init():
        acc_ref[...] = jnp.zeros_like(acc_ref)

    acc_ref[...] += jnp.dot(x_ref[...], w_ref[...],
                            preferred_element_type=jnp.float32)

    @pl.when(k == pl.num_programs(3) - 1)
    def _finalize():
        o_ref[...] = (acc_ref[...]
                      + b_ref[...].astype(jnp.float32)).astype(o_ref.dtype)


def split_balanced_linear(x, weights, bias, *, force_tiled=False,
                          tm=256, tn=512, tk=512):
    """x: (2, N, In); weights: (2, In, Out); bias: (2, 1, Out) -> (2, N, Out)."""
    s, n, in_size = x.shape
    out_size = weights.shape[2]
    assert s == 2 and weights.shape == (2, in_size, out_size)
    assert bias.shape == (2, 1, out_size)

    # Clamp tiles to the (alignment-padded) problem size; Out/In tiles stay
    # 128-multiples so stores are lane-dense and the MXU K/N dims are >= 128.
    tm = min(tm, _round_up(n, 8))
    tn = min(tn, _round_up(out_size, 128))
    tk = min(tk, _round_up(in_size, 128))
    n_pad = _round_up(n, tm)
    out_pad = _round_up(out_size, tn)
    in_pad = _round_up(in_size, tk)

    # Zero-pad (padded weight columns / bias entries are zero -> padded output
    # region is exactly zero and gets sliced off below).
    xp = x if (n_pad == n and in_pad == in_size) else jnp.pad(
        x, ((0, 0), (0, n_pad - n), (0, in_pad - in_size)))
    wp = weights if (in_pad == in_size and out_pad == out_size) else jnp.pad(
        weights, ((0, 0), (0, in_pad - in_size), (0, out_pad - out_size)))
    bp = bias if out_pad == out_size else jnp.pad(
        bias, ((0, 0), (0, 0), (0, out_pad - out_size)))

    total_bytes = 4 * 2 * (n_pad * in_pad + in_pad * out_pad + out_pad
                           + n_pad * out_pad)
    cost = pl.CostEstimate(flops=2 * 2 * n_pad * in_pad * out_pad,
                           transcendentals=0,
                           bytes_accessed=total_bytes)

    # Per-split working set (elements are x.dtype; accumulate/bias in f32).
    per_split_bytes = 4 * (n_pad * in_pad + in_pad * out_pad + out_pad
                           + n_pad * out_pad)
    # Double-buffered across the 2 grid steps -> ~2x per-split resident.
    use_small = (not force_tiled) and (2 * per_split_bytes) <= (12 << 20)

    if use_small:
        out = pl.pallas_call(
            _small_kernel,
            out_shape=jax.ShapeDtypeStruct((2, n_pad, out_pad), x.dtype),
            grid_spec=pltpu.PrefetchScalarGridSpec(
                num_scalar_prefetch=0,
                grid=(2,),
                in_specs=[
                    pl.BlockSpec((None, n_pad, in_pad), lambda si: (si, 0, 0)),
                    pl.BlockSpec((None, in_pad, out_pad), lambda si: (si, 0, 0)),
                    pl.BlockSpec((None, 1, out_pad), lambda si: (si, 0, 0)),
                ],
                out_specs=pl.BlockSpec((None, n_pad, out_pad),
                                       lambda si: (si, 0, 0)),
            ),
            compiler_params=pltpu.CompilerParams(
                dimension_semantics=("parallel",),
                vmem_limit_bytes=48 * 1024 * 1024),
            cost_estimate=cost,
        )(xp, wp, bp)
    else:
        grid = (2, out_pad // tn, n_pad // tm, in_pad // tk)
        # Double-buffered inputs + output + f32 accumulator, with headroom.
        vmem_need = 4 * (2 * (tm * tk + tk * tn + tm * tn + tn) + tm * tn)
        vmem_limit = min(max(4 * vmem_need, 32 * 1024 * 1024), 64 * 1024 * 1024)
        out = pl.pallas_call(
            _tiled_kernel,
            out_shape=jax.ShapeDtypeStruct((2, n_pad, out_pad), x.dtype),
            grid_spec=pltpu.PrefetchScalarGridSpec(
                num_scalar_prefetch=0,
                grid=grid,
                in_specs=[
                    # x: ignores the Out-tile axis.
                    pl.BlockSpec((None, tm, tk), lambda si, j, i, k: (si, i, k)),
                    # weights: ignore the row-tile axis (weight-stationary order).
                    pl.BlockSpec((None, tk, tn), lambda si, j, i, k: (si, k, j)),
                    # bias: one (1, tn) strip per Out tile (re-fetched only when
                    # the Out-tile index changes).
                    pl.BlockSpec((None, 1, tn), lambda si, j, i, k: (si, 0, j)),
                ],
                out_specs=pl.BlockSpec((None, tm, tn),
                                       lambda si, j, i, k: (si, i, j)),
                scratch_shapes=[pltpu.VMEM((tm, tn), jnp.float32)],
            ),
            compiler_params=pltpu.CompilerParams(
                dimension_semantics=("parallel", "parallel", "parallel",
                                     "arbitrary"),
                vmem_limit_bytes=vmem_limit),
            cost_estimate=cost,
        )(xp, wp, bp)

    if n_pad != n or out_pad != out_size:
        out = out[:, :n, :out_size]
    return out


def init_params(key, input_size, output_size, dtype=jnp.float32):
    """Deterministic init matching the PyTorch module's init distributions.

    For a 3-D weight of shape (2, In, Out), PyTorch's fan_in = In * Out, and
    kaiming_uniform_(a=sqrt(5)) gives bound = 1/sqrt(fan_in); the bias uses
    the same bound.
    """
    k_w, k_b = jax.random.split(key)
    fan_in = input_size * output_size
    bound = 1.0 / math.sqrt(fan_in)
    weights = jax.random.uniform(
        k_w, (2, input_size, output_size), dtype=dtype, minval=-bound, maxval=bound)
    bias = jax.random.uniform(
        k_b, (2, 1, output_size), dtype=dtype, minval=-bound, maxval=bound)
    return weights, bias


if __name__ == "__main__":
    key = jax.random.PRNGKey(0)
    k_x, k_p, k_x2, k_p2 = jax.random.split(key, 4)

    # --- tiny demo shapes (typical for the PINN module) -> fused small path ---
    input_size, output_size, n = 32, 32, 8
    x = jax.random.normal(k_x, (2, n, input_size), dtype=jnp.float32)
    weights, bias = init_params(k_p, input_size, output_size)
    out = jax.block_until_ready(split_balanced_linear(x, weights, bias))
    ref = jnp.matmul(x, weights) + bias
    assert out.shape == (2, n, output_size)
    assert jnp.allclose(out, ref, atol=1e-4, rtol=1e-4)

    # --- larger shapes -> tiled path with multi-step K reduction/accumulator ---
    in2, out2, n2 = 1024, 512, 256
    x2 = jax.random.normal(k_x2, (2, n2, in2), dtype=jnp.float32)
    w2, b2 = init_params(k_p2, in2, out2)
    out_t = jax.block_until_ready(
        split_balanced_linear(x2, w2, b2, force_tiled=True))
    ref2 = jnp.matmul(x2, w2) + b2
    assert out_t.shape == (2, n2, out2)
    assert jnp.allclose(out_t, ref2, atol=1e-2, rtol=1e-2)

    print("KERNEL_OK")
</pallas_src>

<mosaic_0001>
module attributes {stable_mosaic.version = 11 : i64} {
  func.func @_small_kernel(%arg0: i32, %arg1: memref<1x8x128xf32, #tpu.memory_space<vmem>>, %arg2: memref<1x128x128xf32, #tpu.memory_space<vmem>>, %arg3: memref<1x1x128xf32, #tpu.memory_space<vmem>>, %arg4: memref<1x8x128xf32, #tpu.memory_space<vmem>>) attributes {dimension_semantics = [#tpu.dimension_semantics<parallel>], iteration_bounds = array<i64: 2>, scalar_prefetch = 0 : i64, scratch_operands = 0 : i64, tpu.core_type = #tpu.core_type<tc>, window_params = [{transform_indices = @transform_0, window_bounds = array<i64: 1, 8, 128>}, {transform_indices = @transform_1, window_bounds = array<i64: 1, 128, 128>}, {transform_indices = @transform_2, window_bounds = array<i64: 1, 1, 128>}, {transform_indices = @transform_3, window_bounds = array<i64: 1, 8, 128>}]} {
    %c0 = arith.constant 0 : index
    %c0_0 = arith.constant 0 : index
    %c0_1 = arith.constant 0 : index
    %0 = vector.load %arg1[%c0, %c0_0, %c0_1] : memref<1x8x128xf32, #tpu.memory_space<vmem>>, vector<1x8x128xf32>
    %1 = vector.shape_cast %0 : vector<1x8x128xf32> to vector<8x128xf32>
    %c0_2 = arith.constant 0 : index
    %c0_3 = arith.constant 0 : index
    %c0_4 = arith.constant 0 : index
    %2 = vector.load %arg2[%c0_2, %c0_3, %c0_4] : memref<1x128x128xf32, #tpu.memory_space<vmem>>, vector<1x128x128xf32>
    %3 = vector.shape_cast %2 : vector<1x128x128xf32> to vector<128x128xf32>
    %cst = arith.constant dense<0.000000e+00> : vector<8x128xf32>
    %4 = tpu.matmul %1, %3, %cst {dimension_numbers = #tpu.dot_dimension_numbers<[1], [0], [0], [1], [0, 0, 1, 1], [], []>} : vector<8x128xf32>, vector<128x128xf32>, vector<8x128xf32> -> vector<8x128xf32>
    %c0_5 = arith.constant 0 : index
    %c0_6 = arith.constant 0 : index
    %c0_7 = arith.constant 0 : index
    %5 = vector.load %arg3[%c0_5, %c0_6, %c0_7] : memref<1x1x128xf32, #tpu.memory_space<vmem>>, vector<1x1x128xf32>
    %6 = vector.shape_cast %5 : vector<1x1x128xf32> to vector<1x128xf32>
    %7 = vector.broadcast %6 : vector<1x128xf32> to vector<8x128xf32>
    %8 = arith.addf %4, %7 : vector<8x128xf32>
    %c0_8 = arith.constant 0 : index
    %c0_9 = arith.constant 0 : index
    %c0_10 = arith.constant 0 : index
    %9 = vector.load %arg4[%c0_8, %c0_9, %c0_10] : memref<1x8x128xf32, #tpu.memory_space<vmem>>, vector<1x8x128xf32>
    %10 = vector.shape_cast %9 : vector<1x8x128xf32> to vector<8x128xf32>
    %11 = vector.shape_cast %8 : vector<8x128xf32> to vector<1x8x128xf32>
    tpu.vector_store %arg4[%c0_8, %c0_9, %c0_10], %11 {strides = array<i32>} : memref<1x8x128xf32, #tpu.memory_space<vmem>>, vector<1x8x128xf32>,
    return
  }
  func.func @transform_0(%arg0: i32) -> (i32, i32, i32) {
    %c0_i32 = arith.constant 0 : i32
    %c0_i32_0 = arith.constant 0 : i32
    %c0_i32_1 = arith.constant 0 : i32
    return %arg0, %c0_i32, %c0_i32_0 : i32, i32, i32
  }
  func.func @transform_1(%arg0: i32) -> (i32, i32, i32) {
    %c0_i32 = arith.constant 0 : i32
    %c0_i32_0 = arith.constant 0 : i32
    %c0_i32_1 = arith.constant 0 : i32
    return %arg0, %c0_i32, %c0_i32_0 : i32, i32, i32
  }
  func.func @transform_2(%arg0: i32) -> (i32, i32, i32) {
    %c0_i32 = arith.constant 0 : i32
    %c0_i32_0 = arith.constant 0 : i32
    %c0_i32_1 = arith.constant 0 : i32
    return %arg0, %c0_i32, %c0_i32_0 : i32, i32, i32
  }
  func.func @transform_3(%arg0: i32) -> (i32, i32, i32) {
    %c0_i32 = arith.constant 0 : i32
    %c0_i32_0 = arith.constant 0 : i32
    %c0_i32_1 = arith.constant 0 : i32
    return %arg0, %c0_i32, %c0_i32_0 : i32, i32, i32
  }
}

</mosaic_0001>

<llo_original>
// kernel: tpu_custom_call.1
$region0: #{tpu_custom_call.1}
  #allocation0 [shape = 'u32[]', space=smem, size = 0x4, offset = 0x4, fixed_abs, tag = 'smem constant byte address 0x4 - core index']
  #allocation1 [shape = 'u32[144,128]{1,0:T(1,128)}', space=vmem, size = 0x12000, scoped, tag = 'internal scratch']
  %s0 = inlined_call_operand.hbm [shape: f32[2,8,128], index: 0, kind: input, shape index: {}]
  %s1 = inlined_call_operand.hbm [shape: f32[2,128,128], index: 1, kind: input, shape index: {}]
  %s2 = inlined_call_operand.vmem [shape: f32[2,1,128], index: 2, kind: input, shape index: {}]
  %s3 = inlined_call_operand.hbm [shape: f32[2,8,128], index: 3, kind: output, shape index: {}]
  %s4 = sld [smem:[#allocation0]]
  $region53: #{tpu_custom_call.1} parent=0
    _
  %s6 = ssub.s32 1, %s4
  %s7 = scalar_select 0, %s6, %s4
  $region1: #{tpu_custom_call.1} parent=0
    #allocation2 [shape = 'u8[8192]{0}', space=vmem, size = 0x2000, scoped, tag = 'input window, operand 0']
    #allocation3 [shape = 's32[2]{0}', space=sflag, size = 0x8, scoped, tag = 'scoped memory for tpu_custom_call.1']
    #allocation4 [shape = 's32[2]{0}', space=sflag, size = 0x8, scoped, tag = 'scoped memory for tpu_custom_call.1']
    #allocation5 [shape = 'u8[131072]{0}', space=vmem, size = 0x20000, scoped, tag = 'input window, operand 1']
    #allocation6 [shape = 's32[2]{0}', space=sflag, size = 0x8, scoped, tag = 'scoped memory for tpu_custom_call.1']
    #allocation7 [shape = 'u8[8192]{0}', space=vmem, size = 0x2000, scoped, tag = 'output window, operand 0']
    %8 = vsyncpa [#allocation3], 0
    %s9 = scalar_lea.sflag [#allocation3], 1
    %10 = vsyncpa %s9, 0
    %11 = vsyncpa [#allocation6], 0
    %s12 = scalar_lea.sflag [#allocation6], 1
    %13 = vsyncpa %s12, 0
    %14 = vsyncpa [#allocation4], 0
    %s15 = scalar_lea.sflag [#allocation4], 1
    %16 = vsyncpa %s15, 0
    loop: start=0, step=1, limit=4
    $region2: #{tpu_custom_call.1} parent=1 // loop_pre_header
      _
    $region3: #{tpu_custom_call.1} parent=1 // loop_header
      %s18 = sphi 0, %s22
      %p19 = scmp.ge.s32.totalorder %s18, 4
      %s28 = sphi 0, %s30
      %s31 = sphi 0, %s28
      %s32 = sphi 0, %s31
      %s48 = sphi 0, %s32
      %s54 = sphi 0, %s56
      %s57 = sphi 0, %s54
      %s58 = sphi 0, %s57
      %s74 = sphi 0, %s58
      %s80 = sphi 0, %s82
      %s83 = sphi 0, %s80
      %s84 = sphi 0, %s83
      %s100 = sphi 0, %s84
      %s106 = sphi 0, %s108
      %s109 = sphi 0, %s106
      %s110 = sphi 0, %s109
      %s126 = sphi 0, %s110
    $region4: #{tpu_custom_call.1} parent=1 // loop_header_branch
      %21 = sbr.rel (%p19) target = $region8
    $region5: #{tpu_custom_call.1} parent=1 // loop_body
      %s23 = ssub.s32 %s18, 1
      %s24 = ssub.s32 %s18, 2
      %s25 = sadd.s32 %s18, 1
      %s26 = ssub.s32 %s18, %s25
      %p27 = scmp.eq.s32.totalorder %s26, 0
      %s29 = sadd.s32 %s28, 1
      %s30 = scalar_select %p27, %s28, %s29
      %p33 = pneg %p27
      %p34 = scmp.eq.s32.totalorder %s18, 1
      %p35 = por %p33, %p34
      %p36 = scmp.ne.s32.totalorder %s28, %s31
      %p37 = scmp.eq.s32.totalorder %s18, 0
      %p38 = por %p36, %p37
      %p39 = scmp.ne.s32.totalorder %s28, %s31
      %p40 = scmp.eq.s32.totalorder %s23, 1
      %p41 = por %p39, %p40
      %p42 = scmp.ne.s32.totalorder %s31, %s32
      %p43 = scmp.eq.s32.totalorder %s23, 0
      %p44 = por %p42, %p43
      %p45 = scmp.ne.s32.totalorder %s31, %s32
      %p46 = scmp.eq.s32.totalorder %s24, 1
      %p47 = por %p45, %p46
      %p49 = scmp.ne.s32.totalorder %s32, %s48
      %p50 = scmp.eq.s32.totalorder %s24, 0
      %p51 = por %p49, %p50
      %s52 = ssub.s32 %s18, %s25
      %p53 = scmp.eq.s32.totalorder %s52, 0
      %s55 = sadd.s32 %s54, 1
      %s56 = scalar_select %p53, %s54, %s55
      %p59 = pneg %p53
      %p60 = scmp.eq.s32.totalorder %s18, 1
      %p61 = por %p59, %p60
      %p62 = scmp.ne.s32.totalorder %s54, %s57
      %p63 = scmp.eq.s32.totalorder %s18, 0
      %p64 = por %p62, %p63
      %p65 = scmp.ne.s32.totalorder %s54, %s57
      %p66 = scmp.eq.s32.totalorder %s23, 1
      %p67 = por %p65, %p66
      %p68 = scmp.ne.s32.totalorder %s57, %s58
      %p69 = scmp.eq.s32.totalorder %s23, 0
      %p70 = por %p68, %p69
      %p71 = scmp.ne.s32.totalorder %s57, %s58
      %p72 = scmp.eq.s32.totalorder %s24, 1
      %p73 = por %p71, %p72
      %p75 = scmp.ne.s32.totalorder %s58, %s74
      %p76 = scmp.eq.s32.totalorder %s24, 0
      %p77 = por %p75, %p76
      %s78 = ssub.s32 %s18, %s25
      %p79 = scmp.eq.s32.totalorder %s78, 0
      %s81 = sadd.s32 %s80, 1
      %s82 = scalar_select %p79, %s80, %s81
      %p85 = pneg %p79
      %p86 = scmp.eq.s32.totalorder %s18, 1
      %p87 = por %p85, %p86
      %p88 = scmp.ne.s32.totalorder %s80, %s83
      %p89 = scmp.eq.s32.totalorder %s18, 0
      %p90 = por %p88, %p89
      %p91 = scmp.ne.s32.totalorder %s80, %s83
      %p92 = scmp.eq.s32.totalorder %s23, 1
      %p93 = por %p91, %p92
      %p94 = scmp.ne.s32.totalorder %s83, %s84
      %p95 = scmp.eq.s32.totalorder %s23, 0
      %p96 = por %p94, %p95
      %p97 = scmp.ne.s32.totalorder %s83, %s84
      %p98 = scmp.eq.s32.totalorder %s24, 1
      %p99 = por %p97, %p98
      %p101 = scmp.ne.s32.totalorder %s84, %s100
      %p102 = scmp.eq.s32.totalorder %s24, 0
      %p103 = por %p101, %p102
      %s104 = ssub.s32 %s18, %s25
      %p105 = scmp.eq.s32.totalorder %s104, 0
      %s107 = sadd.s32 %s106, 1
      %s108 = scalar_select %p105, %s106, %s107
      %p111 = pneg %p105
      %p112 = scmp.eq.s32.totalorder %s18, 1
      %p113 = por %p111, %p112
      %p114 = scmp.ne.s32.totalorder %s106, %s109
      %p115 = scmp.eq.s32.totalorder %s18, 0
      %p116 = por %p114, %p115
      %p117 = scmp.ne.s32.totalorder %s106, %s109
      %p118 = scmp.eq.s32.totalorder %s23, 1
      %p119 = por %p117, %p118
      %p120 = scmp.ne.s32.totalorder %s109, %s110
      %p121 = scmp.eq.s32.totalorder %s23, 0
      %p122 = por %p120, %p121
      %p123 = scmp.ne.s32.totalorder %s109, %s110
      %p124 = scmp.eq.s32.totalorder %s24, 1
      %p125 = por %p123, %p124
      %p127 = scmp.ne.s32.totalorder %s110, %s126
      %p128 = scmp.eq.s32.totalorder %s24, 0
      %p129 = por %p127, %p128
      %p130 = scmp.le.s32.totalorder 1, %s18
      %p131 = scmp.lt.s32.totalorder %s18, 3
      %p132 = pnand %p130, %p131
      %p133 = pneg %p132
      // Predicated region
      $region9: #{tpu_custom_call.1} parent=5 // pred_check
        _
      $region10: #{tpu_custom_call.1} parent=5 // pred_check_branch
        %135 = sbr.rel (%p132) target = $region12
      $region11: #{tpu_custom_call.1} parent=5 // pred_region
        %s136 = ssub.s32 %s18, 1
      $region12: #{tpu_custom_call.1} parent=5 // pred_fallthru
        _
      %p137 = scmp.lt.s32.totalorder %s18, 2
      // Predicated region
      $region13: #{tpu_custom_call.1} parent=5 // pred_check
        %p138 = pneg %p137
      $region14: #{tpu_custom_call.1} parent=5 // pred_check_branch
        %140 = sbr.rel (%p138) target = $region16
      $region15: #{tpu_custom_call.1} parent=5 // pred_region
        // Predicated region
        $region17: #{tpu_custom_call.1} parent=15 // pred_check
          %p141 = pneg %p38
        $region18: #{tpu_custom_call.1} parent=15 // pred_check_branch
          %143 = sbr.rel (%p141) target = $region20
        $region19: #{tpu_custom_call.1} parent=15 // pred_region
          %s144 = sand.u32 %s28, 1
          %s145 = scalar_lea.sflag [#allocation3], %s144
          %s146 = sand.u32 %s28, 1
          %s147 = smul.addr %s146, 8
          %s148 = scalar_lea.vmem [#allocation2], %s147
          %s150 = ssub.s32 128, 128
          %151 = vsyncadd %s145, %s150
          %s152 = smul.addr %s18, 128
          %s153 = scalar_lea.hbm %s0, %s152
          %s155 = sshll.u32 %s148, 4
          %s156 = int_to_ptr.vmem [resolvable:$true] %s155
          %158 = dma.hbm_to_vmem [thread:$0]  %s153, 128, %s156, %s145
        $region20: #{tpu_custom_call.1} parent=15 // pred_fallthru
          _
        // Predicated region
        $region21: #{tpu_custom_call.1} parent=15 // pred_check
          %p159 = pneg %p64
        $region22: #{tpu_custom_call.1} parent=15 // pred_check_branch
          %161 = sbr.rel (%p159) target = $region24
        $region23: #{tpu_custom_call.1} parent=15 // pred_region
          %s162 = sand.u32 %s54, 1
          %s163 = scalar_lea.sflag [#allocation6], %s162
          %s164 = sand.u32 %s54, 1
          %s165 = smul.addr %s164, 128
          %s166 = scalar_lea.vmem [#allocation5], %s165
          %s168 = ssub.s32 2048, 2048
          %169 = vsyncadd %s163, %s168
          %s170 = smul.addr %s18, 16
          %s171 = smul.addr %s170, 128
          %s172 = scalar_lea.hbm %s1, %s171
          %s173 = sshll.u32 %s166, 4
          %s174 = int_to_ptr.vmem [resolvable:$true] %s173
          %179 = dma.hbm_to_vmem [thread:$0]  %s172, 2048, %s174, %s163, 128, 128, 8
        $region24: #{tpu_custom_call.1} parent=15 // pred_fallthru
          _
        // Predicated region
        $region25: #{tpu_custom_call.1} parent=15 // pred_check
          %p180 = pneg %p90
        $region26: #{tpu_custom_call.1} parent=15 // pred_check_branch
          %182 = sbr.rel (%p180) target = $region28
        $region27: #{tpu_custom_call.1} parent=15 // pred_region
          %p183 = scmp.lt.s32.totalorder %s18, 1
          %s184 = scalar_select %p183, %s18, 1
          %s185 = scalar_lea.vmem %s2, %s184
        $region28: #{tpu_custom_call.1} parent=15 // pred_fallthru
          _
      $region16: #{tpu_custom_call.1} parent=5 // pred_fallthru
        _
      %p186 = scmp.le.s32.totalorder 1, %s18
      %p187 = scmp.lt.s32.totalorder %s18, 3
      %p188 = pnand %p186, %p187
      %p189 = pneg %p188
      // Predicated region
      $region29: #{tpu_custom_call.1} parent=5 // pred_check
        _
      $region30: #{tpu_custom_call.1} parent=5 // pred_check_branch
        %191 = sbr.rel (%p188) target = $region32
      $region31: #{tpu_custom_call.1} parent=5 // pred_region
        %s192 = ssub.s32 %s18, 1
        %s193 = sand.u32 %s31, 1
        %s194 = scalar_lea.sflag [#allocation3], %s193
        %s195 = sand.u32 %s31, 1
        %s196 = smul.addr %s195, 8
        %s197 = scalar_lea.vmem [#allocation2], %s196
        // Predicated region
        $region33: #{tpu_custom_call.1} parent=31 // pred_check
          %p198 = pneg %p44
        $region34: #{tpu_custom_call.1} parent=31 // pred_check_branch
          %200 = sbr.rel (%p198) target = $region36
        $region35: #{tpu_custom_call.1} parent=31 // pred_region
          %201 = dma.done %s194, 128
        $region36: #{tpu_custom_call.1} parent=31 // pred_fallthru
          _
        %s202 = sand.u32 %s57, 1
        %s203 = scalar_lea.sflag [#allocation6], %s202
        %s204 = sand.u32 %s57, 1
        %s205 = smul.addr %s204, 128
        %s206 = scalar_lea.vmem [#allocation5], %s205
        // Predicated region
        $region37: #{tpu_custom_call.1} parent=31 // pred_check
          %p207 = pneg %p70
        $region38: #{tpu_custom_call.1} parent=31 // pred_check_branch
          %209 = sbr.rel (%p207) target = $region40
        $region39: #{tpu_custom_call.1} parent=31 // pred_region
          %210 = dma.done %s203, 2048
        $region40: #{tpu_custom_call.1} parent=31 // pred_fallthru
          _
        %s211 = sand.u32 %s31, 1
        %s212 = scalar_lea.sflag [#allocation3], %s211
        %s213 = sand.u32 %s31, 1
        %s214 = smul.addr %s213, 8
        %s215 = scalar_lea.vmem [#allocation2], %s214
        %p216 = pneg %p44
        %p217 = pneg %p41
        %s218 = sand.u32 %s57, 1
        %s219 = scalar_lea.sflag [#allocation6], %s218
        %s220 = sand.u32 %s57, 1
        %s221 = smul.addr %s220, 128
        %s222 = scalar_lea.vmem [#allocation5], %s221
        %p223 = pneg %p70
        %p224 = pneg %p67
        %p225 = scmp.lt.s32.totalorder %s23, 1
        %s226 = scalar_select %p225, %s23, 1
        %s227 = scalar_lea.vmem %s2, %s226
        %p228 = pneg %p96
        %p229 = pneg %p93
        %p230 = pneg %p122
        %p231 = pneg %p119
        %s232 = sand.u32 %s109, 1
        %s233 = scalar_lea.sflag [#allocation4], %s232
        %s234 = sand.u32 %s109, 1
        %s235 = smul.addr %s234, 8
        %s236 = scalar_lea.vmem [#allocation7], %s235
        %p237 = scmp.lt.s32.totalorder %s23, 1
        %s238 = scalar_select %p237, %s23, 1
        %s239 = scalar_lea.vmem %s2, %s238
        %v240 = vld [vmem:[%s197] sm:$0xff]
        %v241 = vld [vmem:[%s206] sm:$0xff]
        %v242 = vld [vmem:[%s206 + $0x8] sm:$0xff]
        %v243 = vld [vmem:[%s206 + $0x10] sm:$0xff]
        %v244 = vld [vmem:[%s206 + $0x18] sm:$0xff]
        %v245 = vld [vmem:[%s206 + $0x20] sm:$0xff]
        %v246 = vld [vmem:[%s206 + $0x28] sm:$0xff]
        %v247 = vld [vmem:[%s206 + $0x30] sm:$0xff]
        %v248 = vld [vmem:[%s206 + $0x38] sm:$0xff]
        %v249 = vld [vmem:[%s206 + $0x40] sm:$0xff]
        %v250 = vld [vmem:[%s206 + $0x48] sm:$0xff]
        %v251 = vld [vmem:[%s206 + $0x50] sm:$0xff]
        %v252 = vld [vmem:[%s206 + $0x58] sm:$0xff]
        %v253 = vld [vmem:[%s206 + $0x60] sm:$0xff]
        %v254 = vld [vmem:[%s206 + $0x68] sm:$0xff]
        %v255 = vld [vmem:[%s206 + $0x70] sm:$0xff]
        %v256 = vld [vmem:[%s206 + $0x78] sm:$0xff]
        %v257 = vld [vmem:[%s239] sm:$0x1]
        %v259 = vlaneseq
        %v260 = vshrl.u32 %v259, 7
        %v261 = vsub.s32 0, %v260
        %v262 = vrot.slane %v257, %v261
        %264 = vmatprep.subr.mxu0 0.0
        %265 = vmatpush1.msra.mxu0 %v241
        %266 = vmatprep.subr.mxu0 0.0
        %267 = vmatpush1.msra.mxu0 %v242
        %268 = vmatprep.subr.mxu0 0.0
        %269 = vmatpush1.msra.mxu0 %v243
        %270 = vmatprep.subr.mxu0 0.0
        %271 = vmatpush1.msra.mxu0 %v244
        %272 = vmatprep.subr.mxu0 0.0
        %273 = vmatpush1.msra.mxu0 %v245
        %274 = vmatprep.subr.mxu0 0.0
        %275 = vmatpush1.msra.mxu0 %v246
        %276 = vmatprep.subr.mxu0 0.0
        %277 = vmatpush1.msra.mxu0 %v247
        %278 = vmatprep.subr.mxu0 0.0
        %279 = vmatpush1.msra.mxu0 %v248
        %280 = vmatprep.subr.mxu0 0.0
        %281 = vmatpush1.msra.mxu0 %v249
        %282 = vmatprep.subr.mxu0 0.0
        %283 = vmatpush1.msra.mxu0 %v250
        %284 = vmatprep.subr.mxu0 0.0
        %285 = vmatpush1.msra.mxu0 %v251
        %286 = vmatprep.subr.mxu0 0.0
        %287 = vmatpush1.msra.mxu0 %v252
        %288 = vmatprep.subr.mxu0 0.0
        %289 = vmatpush1.msra.mxu0 %v253
        %290 = vmatprep.subr.mxu0 0.0
        %291 = vmatpush1.msra.mxu0 %v254
        %292 = vmatprep.subr.mxu0 0.0
        %293 = vmatpush1.msra.mxu0 %v255
        %294 = vmatprep.subr.mxu0 0.0
        %295 = vmatpush1.msra.mxu0 %v256
        %296 = vmatprep.subr.mxu0 0.0
        %297 = vmatpush1.msra.mxu0 0.0
        %298 = vmatprep.subr.mxu0 0.0
        %299 = vmatpush1.msra.mxu0 0.0
        %300 = vmatprep.subr.mxu0 0.0
        %301 = vmatpush1.msra.mxu0 0.0
        %302 = vmatprep.subr.mxu0 0.0
        %303 = vmatpush1.msra.mxu0 0.0
        %304 = vmatprep.subr.mxu0 0.0
        %305 = vmatpush1.msra.mxu0 0.0
        %306 = vmatprep.subr.mxu0 0.0
        %307 = vmatpush1.msra.mxu0 0.0
        %308 = vmatprep.subr.mxu0 0.0
        %309 = vmatpush1.msra.mxu0 0.0
        %310 = vmatprep.subr.mxu0 0.0
        %311 = vmatpush1.msra.mxu0 0.0
        %312 = vmatprep.subr.mxu0 0.0
        %313 = vmatpush1.msra.mxu0 0.0
        %314 = vmatprep.subr.mxu0 0.0
        %315 = vmatpush1.msra.mxu0 0.0
        %316 = vmatprep.subr.mxu0 0.0
        %317 = vmatpush1.msra.mxu0 0.0
        %318 = vmatprep.subr.mxu0 0.0
        %319 = vmatpush1.msra.mxu0 0.0
        %320 = vmatprep.subr.mxu0 0.0
        %321 = vmatpush1.msra.mxu0 0.0
        %322 = vmatprep.subr.mxu0 0.0
        %323 = vmatpush1.msra.mxu0 0.0
        %324 = vmatprep.subr.mxu0 0.0
        %325 = vmatpush1.msra.mxu0 0.0
        %326 = vmatprep.subr.mxu0 0.0
        %327 = vmatpush1.msra.mxu0 0.0
        %328 = vmatprep.mubr.f32.mxu0 0.0
        %329 = vmatmul.mubr.f32.gmra.mrb[0].mxu0 %v240
        %v330 = vpop.f32.mrb[0].mxu0
        %v331 = vadd.f32 %v262, %v330
        %v332 = vpop.f32.mrb[0].mxu0
        %333 = vdwg.mxu0
        %334 = vst [vmem:[%s236] sm:$0xff] %v331
        %s335 = sand.u32 %s109, 1
        %s336 = scalar_lea.sflag [#allocation4], %s335
        %s337 = sand.u32 %s109, 1
        %s338 = smul.addr %s337, 8
        %s339 = scalar_lea.vmem [#allocation7], %s338
        // Predicated region
        $region41: #{tpu_custom_call.1} parent=31 // pred_check
          %p340 = pneg %p119
        $region42: #{tpu_custom_call.1} parent=31 // pred_check_branch
          %342 = sbr.rel (%p340) target = $region44
        $region43: #{tpu_custom_call.1} parent=31 // pred_region
          %s344 = ssub.s32 128, 128
          %345 = vsyncadd %s336, %s344
          %s346 = smul.addr %s23, 128
          %s347 = scalar_lea.hbm %s3, %s346
          %s349 = sshll.u32 %s339, 4
          %s350 = int_to_ptr.vmem [resolvable:$true] %s349
          %352 = dma.vmem_to_hbm [thread:$0]  %s350, 128, %s347, %s336
        $region44: #{tpu_custom_call.1} parent=31 // pred_fallthru
          _
      $region32: #{tpu_custom_call.1} parent=5 // pred_fallthru
        _
      %p353 = scmp.le.s32.totalorder 2, %s18
      // Predicated region
      $region45: #{tpu_custom_call.1} parent=5 // pred_check
        %p354 = pneg %p353
      $region46: #{tpu_custom_call.1} parent=5 // pred_check_branch
        %356 = sbr.rel (%p354) target = $region48
      $region47: #{tpu_custom_call.1} parent=5 // pred_region
        %s357 = ssub.s32 %s18, 2
        // Predicated region
        $region49: #{tpu_custom_call.1} parent=47 // pred_check
          %p358 = pneg %p125
        $region50: #{tpu_custom_call.1} parent=47 // pred_check_branch
          %360 = sbr.rel (%p358) target = $region52
        $region51: #{tpu_custom_call.1} parent=47 // pred_region
          %s361 = sand.u32 %s110, 1
          %s362 = scalar_lea.sflag [#allocation4], %s361
          %s363 = sand.u32 %s110, 1
          %s364 = smul.addr %s363, 8
          %s365 = scalar_lea.vmem [#allocation7], %s364
          %366 = dma.done %s362, 128
        $region52: #{tpu_custom_call.1} parent=47 // pred_fallthru
          _
      $region48: #{tpu_custom_call.1} parent=5 // pred_fallthru
        _
    $region6: #{tpu_custom_call.1} parent=1 // loop_footer
      %s22 = sadd.s32 1, %s18
    $region7: #{tpu_custom_call.1} parent=1 // loop_footer_branch
      %17 = sbr.rel target = $region3
    $region8: #{tpu_custom_call.1} parent=1 // loop_exit
      _
    %367 = vsyncpa [#allocation3], 1
    %s368 = scalar_lea.sflag [#allocation3], 1
    %369 = vsyncpa %s368, 1
    %370 = vsyncpa [#allocation6], 1
    %s371 = scalar_lea.sflag [#allocation6], 1
    %372 = vsyncpa %s371, 1
    %373 = vsyncpa [#allocation4], 1
    %s374 = scalar_lea.sflag [#allocation4], 1
    %375 = vsyncpa %s374, 1

</llo_original>
